<compile_context>
chip_gen: v7x
topology: tpu7x:2x2x1
jax: 0.10.0
libtpu: 0.0.40
codegen_flags: <defaults>
</compile_context>

<pallas_src>
import functools
import math

import jax
import jax.numpy as jnp
from jax.experimental import pallas as pl
from jax.experimental.pallas import tpu as pltpu


# BCE(x=-1e4, t=0) underflows to exactly 0.0 in f32 (and pt == 1.0), so padded
# elements contribute exactly zero loss for any gamma >= 0.
_PAD_LOGIT = -1.0e4


def _focal_loss_kernel(x_ref, t_ref, partial_ref, *, alpha, gamma,
                       binary_targets, rows_total, block_rows, needs_mask):
    """One lane-dense (block_rows, width) tile -> (1, width) partial sum."""
    x = x_ref[...].astype(jnp.float32)
    t = t_ref[...].astype(jnp.float32)

    # Numerically-stable BCE with logits (== F.binary_cross_entropy_with_logits):
    #   bce = max(x, 0) - x * t + log1p(exp(-|x|))
    e = jnp.exp(-jnp.abs(x))                              # EUP exp #1
    bce = jnp.maximum(x, 0.0) - x * t + jnp.log1p(e)      # EUP log1p #2

    if binary_targets:
        # Hard {0,1} targets: pt = p if t==1 else (1-p), p = sigmoid(x).
        # Reusing e = exp(-|x|):
        #   x >= 0: p = 1/(1+e), 1-p = e/(1+e)
        #   x <  0: p = e/(1+e), 1-p = 1/(1+e)
        # => pt = where(t == [x>=0], 1, e) / (1 + e).  Mathematically equal to
        # exp(-bce) for binary targets, but replaces the third EUP exp with a
        # divide + VPU select (single-slot EUP is the bottleneck once inputs
        # are fed as bf16/int8).
        pos = (x >= 0.0).astype(jnp.float32)
        num = jnp.where(t == pos, 1.0, e)
        pt = num / (1.0 + e)
    else:
        pt = jnp.exp(-bce)                                # EUP exp #3 (soft targets)

    # Clamp protects the non-integer-gamma pow() path from fp rounding; free.
    one_minus_pt = jnp.maximum(1.0 - pt, 0.0)

    # (1 - pt) ** gamma.  For static integer gamma (default 2.0) use explicit
    # repeated VPU multiplies instead of pow == exp(gamma*log(.)) on the EUP.
    g = float(gamma)
    if g == int(g) and 0 <= int(g) <= 8:
        gi = int(g)
        if gi == 0:
            mod = jnp.ones_like(one_minus_pt)
        else:
            mod = one_minus_pt
            for _ in range(gi - 1):
                mod = mod * one_minus_pt
    else:
        mod = jnp.power(one_minus_pt, g)

    alpha_t = alpha * t + (1.0 - alpha) * (1.0 - t)
    f_loss = alpha_t * mod * bce

    if needs_mask:
        # Last grid block is partial: rows >= rows_total hold unspecified data
        # (Pallas clips the boundary DMA).  Select them to exactly 0 BEFORE
        # the reduce so NaN/Inf can never leak into the partial sums.  For
        # full blocks the compare is all-true: 1 cmp + 1 select per element,
        # hidden under DMA/EUP slack.
        row_ids = jax.lax.broadcasted_iota(jnp.int32, f_loss.shape, 0)
        limit = rows_total - pl.program_id(0) * block_rows
        f_loss = jnp.where(row_ids < limit, f_loss, 0.0)

    # Per-block partial sum reduced only along sublanes (XLU); the tiny
    # cross-block / cross-lane reduce happens once in the wrapper.
    partial_ref[...] = jnp.sum(f_loss, axis=0, keepdims=True)


def focal_loss(inputs, targets, alpha=0.25, gamma=2.0, reduction="mean", *,
               block_elems=1 << 20, max_width=1024, assume_binary_targets=None):
    """Focal loss over logits/targets of any (identical) shape.

    Feed logits as bf16 and targets as bool/int8 where model precision allows
    (the kernel casts to f32 in VMEM) — this op is HBM-bandwidth bound.
    """
    assert inputs.shape == targets.shape
    if isinstance(alpha, (list, tuple)):
        # TODO(synk): per-class (list) alpha needs a class-indexed alpha stream;
        # only scalar alpha is supported by this kernel.
        raise NotImplementedError("list-valued alpha not supported")
    if reduction not in ("mean", "sum"):
        # TODO(synk): reduction='none' (elementwise output) not implemented here.
        raise NotImplementedError("reduction='none' not supported by this kernel")
    assert max_width % 128 == 0 and max_width >= 128

    total = 1
    for d in inputs.shape:
        total *= int(d)

    if assume_binary_targets is None:
        binary_targets = (jnp.issubdtype(targets.dtype, jnp.bool_)
                          or jnp.issubdtype(targets.dtype, jnp.integer))
    else:
        binary_targets = bool(assume_binary_targets)

    x = inputs.reshape(-1)
    t = targets.reshape(-1)

    # Only pad when the total is not lane-aligned (<=127 extra elements); the
    # padded logits give exactly-zero loss (see _PAD_LOGIT note).  Lane-aligned
    # shapes (the common case) take the copy-free path: the ragged row tail of
    # the last grid block is masked inside the kernel instead of materializing
    # padded copies of both inputs (which would ~double HBM traffic on this
    # bandwidth-bound op).
    pad = (-total) % 128
    if pad:
        # TODO(synk): a fully copy-free path for lane-unaligned totals would
        # need a manual-DMA tail; the concat still rewrites the inputs once.
        x = jnp.concatenate([x, jnp.full((pad,), _PAD_LOGIT, dtype=x.dtype)])
        t = jnp.concatenate([t, jnp.zeros((pad,), dtype=t.dtype)])
    n = total + pad

    # Lane-dense slab: the widest multiple of 128 (<= max_width) that divides
    # n exactly, so no column padding is ever required.
    width = 128 * math.gcd(n // 128, max_width // 128)
    rows = n // width

    # Row blocking: target ~block_elems elements per block (default 1 Mi ->
    # 4 MiB/input block in f32; 2 inputs x 2 pipeline buffers = 16 MiB, inside
    # the 32 MiB scoped-VMEM limit and well under v7x's 64 MiB physical VMEM).
    # Round to 32 sublanes so blocks stay tile-aligned for any input dtype
    # (f32: 8, bf16: 16, int8/bool: 32).
    br_target = max(32, block_elems // width)
    if rows <= br_target:
        block_rows = rows               # single block == full array, no row mask
    else:
        block_rows = (br_target // 32) * 32
    num_blocks = pl.cdiv(rows, block_rows)
    needs_mask = (rows % block_rows) != 0

    x2 = x.reshape(rows, width)
    t2 = t.reshape(rows, width)

    kernel = functools.partial(
        _focal_loss_kernel, alpha=float(alpha), gamma=float(gamma),
        binary_targets=binary_targets, rows_total=rows, block_rows=block_rows,
        needs_mask=needs_mask)

    partials = pl.pallas_call(
        kernel,
        out_shape=jax.ShapeDtypeStruct((num_blocks, width), jnp.float32),
        grid=(num_blocks,),
        in_specs=[
            pl.BlockSpec((block_rows, width), lambda i: (i, 0)),
            pl.BlockSpec((block_rows, width), lambda i: (i, 0)),
        ],
        out_specs=pl.BlockSpec((1, width), lambda i: (i, 0)),
        compiler_params=pltpu.CompilerParams(
            # Independent blocks (no carried accumulator) -> v7x can shard the
            # axis across both TensorCores.
            dimension_semantics=("parallel",),
            vmem_limit_bytes=32 * 1024 * 1024,
        ),
    )(x2, t2)

    loss_sum = jnp.sum(partials, dtype=jnp.float32)
    if reduction == "mean":
        return loss_sum / jnp.float32(total)
    return loss_sum


def focal_loss_ref(inputs, targets, alpha=0.25, gamma=2.0):
    """Pure-JAX reference (mean reduction) for correctness checking."""
    x = inputs.astype(jnp.float32)
    t = targets.astype(jnp.float32)
    bce = jnp.maximum(x, 0.0) - x * t + jnp.log1p(jnp.exp(-jnp.abs(x)))
    pt = jnp.exp(-bce)
    alpha_t = alpha * t + (1.0 - alpha) * (1.0 - t)
    return jnp.mean(alpha_t * (1.0 - pt) ** gamma * bce)


if __name__ == "__main__":
    key = jax.random.PRNGKey(0)
    k1, k2, k3, k4, k5, k6 = jax.random.split(key, 6)

    # 1) Small multi-label batch: 16 examples, 128 classes (f32 logits/targets,
    #    module defaults).  Copy-free path, single full-array block.
    B, C = 16, 128
    inputs = jax.random.normal(k1, (B, C), dtype=jnp.float32) * 2.0
    targets = (jax.random.uniform(k2, (B, C)) < 0.3).astype(jnp.float32)

    out = focal_loss(inputs, targets, alpha=0.25, gamma=2.0)
    out = jax.block_until_ready(out)
    ref = focal_loss_ref(inputs, targets, alpha=0.25, gamma=2.0)
    assert jnp.allclose(out, ref, rtol=1e-5, atol=1e-6), (out, ref)

    # 'sum' reduction on the same data.
    out_s = jax.block_until_ready(focal_loss(inputs, targets, reduction="sum"))
    ref_s = ref * jnp.float32(B * C)
    assert jnp.allclose(out_s, ref_s, rtol=1e-5, atol=1e-5), (out_s, ref_s)

    # 2) Ragged / lane-unaligned shape exercises the tiny exact-zero pad path.
    shape2 = (3, 5, 7)
    inputs2 = jax.random.normal(k3, shape2, dtype=jnp.float32) * 3.0
    targets2 = (jax.random.uniform(k4, shape2) < 0.5).astype(jnp.float32)

    out2 = jax.block_until_ready(focal_loss(inputs2, targets2, alpha=0.4, gamma=2.0))
    ref2 = focal_loss_ref(inputs2, targets2, alpha=0.4, gamma=2.0)
    assert jnp.allclose(out2, ref2, rtol=1e-5, atol=1e-6), (out2, ref2)

    # 3) bf16 logits + bool targets: narrow-dtype feed, hard-target EUP fast
    #    path, and a forced small block to exercise the multi-block partial
    #    last block + in-kernel row masking.
    shape3 = (50, 384)
    inputs3 = (jax.random.normal(k5, shape3, dtype=jnp.float32) * 2.0).astype(jnp.bfloat16)
    targets3 = jax.random.uniform(k6, shape3) < 0.3            # bool
    out3 = jax.block_until_ready(
        focal_loss(inputs3, targets3, alpha=0.25, gamma=2.0, block_elems=16 * 1024))
    ref3 = focal_loss_ref(inputs3.astype(jnp.float32), targets3.astype(jnp.float32),
                          alpha=0.25, gamma=2.0)
    assert jnp.allclose(out3, ref3, rtol=1e-4, atol=1e-6), (out3, ref3)

    print("KERNEL_OK")
</pallas_src>

<mosaic_0001>
module attributes {stable_mosaic.version = 11 : i64} {
  func.func @_focal_loss_kernel(%arg0: i32, %arg1: memref<2x1024xf32, #tpu.memory_space<vmem>>, %arg2: memref<2x1024xf32, #tpu.memory_space<vmem>>, %arg3: memref<1x1024xf32, #tpu.memory_space<vmem>>) attributes {dimension_semantics = [#tpu.dimension_semantics<parallel>], iteration_bounds = array<i64: 1>, scalar_prefetch = 0 : i64, scratch_operands = 0 : i64, tpu.core_type = #tpu.core_type<tc>, window_params = [{transform_indices = @transform_0, window_bounds = array<i64: 2, 1024>}, {transform_indices = @transform_1, window_bounds = array<i64: 2, 1024>}, {transform_indices = @transform_2, window_bounds = array<i64: 1, 1024>}]} {
    %c0 = arith.constant 0 : index
    %c0_0 = arith.constant 0 : index
    %0 = vector.load %arg1[%c0, %c0_0] : memref<2x1024xf32, #tpu.memory_space<vmem>>, vector<2x1024xf32>
    %c0_1 = arith.constant 0 : index
    %c0_2 = arith.constant 0 : index
    %1 = vector.load %arg2[%c0_1, %c0_2] : memref<2x1024xf32, #tpu.memory_space<vmem>>, vector<2x1024xf32>
    %2 = math.absf %0 : vector<2x1024xf32>
    %cst = arith.constant 0.000000e+00 : f32
    %3 = vector.broadcast %cst : f32 to vector<2x1024xf32>
    %4 = arith.subf %3, %2 : vector<2x1024xf32>
    %5 = math.exp %4 : vector<2x1024xf32>
    %cst_3 = arith.constant 0.000000e+00 : f32
    %6 = vector.broadcast %cst_3 : f32 to vector<2x1024xf32>
    %7 = arith.maximumf %0, %6 : vector<2x1024xf32>
    %8 = arith.mulf %0, %1 : vector<2x1024xf32>
    %9 = arith.subf %7, %8 : vector<2x1024xf32>
    %10 = math.log1p %5 : vector<2x1024xf32>
    %11 = arith.addf %9, %10 : vector<2x1024xf32>
    %cst_4 = arith.constant 0.000000e+00 : f32
    %12 = vector.broadcast %cst_4 : f32 to vector<2x1024xf32>
    %13 = arith.subf %12, %11 : vector<2x1024xf32>
    %14 = math.exp %13 : vector<2x1024xf32>
    %cst_5 = arith.constant 1.000000e+00 : f32
    %15 = vector.broadcast %cst_5 : f32 to vector<2x1024xf32>
    %16 = arith.subf %15, %14 : vector<2x1024xf32>
    %cst_6 = arith.constant 0.000000e+00 : f32
    %17 = vector.broadcast %cst_6 : f32 to vector<2x1024xf32>
    %18 = arith.maximumf %16, %17 : vector<2x1024xf32>
    %19 = arith.mulf %18, %18 : vector<2x1024xf32>
    %cst_7 = arith.constant 2.500000e-01 : f32
    %20 = vector.broadcast %cst_7 : f32 to vector<2x1024xf32>
    %21 = arith.mulf %20, %1 : vector<2x1024xf32>
    %cst_8 = arith.constant 1.000000e+00 : f32
    %22 = vector.broadcast %cst_8 : f32 to vector<2x1024xf32>
    %23 = arith.subf %22, %1 : vector<2x1024xf32>
    %cst_9 = arith.constant 7.500000e-01 : f32
    %24 = vector.broadcast %cst_9 : f32 to vector<2x1024xf32>
    %25 = arith.mulf %24, %23 : vector<2x1024xf32>
    %26 = arith.addf %21, %25 : vector<2x1024xf32>
    %27 = arith.mulf %26, %19 : vector<2x1024xf32>
    %28 = arith.mulf %27, %11 : vector<2x1024xf32>
    %cst_10 = arith.constant dense<0.000000e+00> : vector<1024xf32>
    %29 = vector.multi_reduction <add>, %28, %cst_10 [0] : vector<2x1024xf32> to vector<1024xf32>
    %30 = vector.shape_cast %29 : vector<1024xf32> to vector<1x1024xf32>
    %c0_11 = arith.constant 0 : index
    %c0_12 = arith.constant 0 : index
    %31 = vector.load %arg3[%c0_11, %c0_12] : memref<1x1024xf32, #tpu.memory_space<vmem>>, vector<1x1024xf32>
    tpu.vector_store %arg3[%c0_11, %c0_12], %30 {strides = array<i32>} : memref<1x1024xf32, #tpu.memory_space<vmem>>, vector<1x1024xf32>,
    return
  }
  func.func @transform_0(%arg0: i32) -> (i32, i32) {
    %c0_i32 = arith.constant 0 : i32
    %c0_i32_0 = arith.constant 0 : i32
    return %arg0, %c0_i32 : i32, i32
  }
  func.func @transform_1(%arg0: i32) -> (i32, i32) {
    %c0_i32 = arith.constant 0 : i32
    %c0_i32_0 = arith.constant 0 : i32
    return %arg0, %c0_i32 : i32, i32
  }
  func.func @transform_2(%arg0: i32) -> (i32, i32) {
    %c0_i32 = arith.constant 0 : i32
    %c0_i32_0 = arith.constant 0 : i32
    return %arg0, %c0_i32 : i32, i32
  }
}

</mosaic_0001>

<llo_original>
// kernel: tpu_custom_call.1
$region0: #{tpu_custom_call.1}
  #allocation0 [shape = 'u32[]', space=smem, size = 0x4, offset = 0x4, fixed_abs, tag = 'smem constant byte address 0x4 - core index']
  #allocation1 [shape = 'u32[144,128]{1,0:T(1,128)}', space=vmem, size = 0x12000, scoped, tag = 'internal scratch']
  %s0 = inlined_call_operand.hbm [shape: f32[2,1024], index: 0, kind: input, shape index: {}]
  %s1 = inlined_call_operand.hbm [shape: f32[2,1024], index: 1, kind: input, shape index: {}]
  %s2 = inlined_call_operand.hbm [shape: f32[1,1024], index: 2, kind: output, shape index: {}]
  %s3 = sld [smem:[#allocation0]]
  $region26: #{tpu_custom_call.1} parent=0
    _
  %s5 = ssub.s32 1, %s3
  %s6 = scalar_select 0, %s5, %s3
  $region1: #{tpu_custom_call.1} parent=0
    #allocation2 [shape = 'u8[8192]{0}', space=vmem, size = 0x2000, scoped, tag = 'input window, operand 0, single buffered']
    #allocation3 [shape = 's32[1]{0}', space=sflag, size = 0x4, scoped, tag = 'scoped memory for tpu_custom_call.1']
    #allocation4 [shape = 's32[1]{0}', space=sflag, size = 0x4, scoped, tag = 'scoped memory for tpu_custom_call.1']
    #allocation5 [shape = 'u8[8192]{0}', space=vmem, size = 0x2000, scoped, tag = 'input window, operand 1, single buffered']
    #allocation6 [shape = 's32[1]{0}', space=sflag, size = 0x4, scoped, tag = 'scoped memory for tpu_custom_call.1']
    #allocation7 [shape = 'u8[4096]{0}', space=vmem, size = 0x1000, scoped, tag = 'output window, operand 0, single buffered']
    %7 = vsyncpa [#allocation3], 0
    %8 = vsyncpa [#allocation6], 0
    %9 = vsyncpa [#allocation4], 0
    // Predicated region
    $region2: #{tpu_custom_call.1} parent=1 // pred_check
      _
    $region3: #{tpu_custom_call.1} parent=1 // pred_check_branch
      %11 = sbr.rel (0) target = $region5
    $region4: #{tpu_custom_call.1} parent=1 // pred_region
      %s13 = ssub.s32 256, 256
      %14 = vsyncadd [#allocation3], %s13
      %s16 = sshll.u32 [#allocation2], 4
      %s17 = int_to_ptr.vmem [resolvable:$true] %s16
      %19 = dma.hbm_to_vmem [thread:$0]  %s0, 256, %s17, [#allocation3]
    $region5: #{tpu_custom_call.1} parent=1 // pred_fallthru
      _
    // Predicated region
    $region6: #{tpu_custom_call.1} parent=1 // pred_check
      _
    $region7: #{tpu_custom_call.1} parent=1 // pred_check_branch
      %21 = sbr.rel (0) target = $region9
    $region8: #{tpu_custom_call.1} parent=1 // pred_region
      %s23 = ssub.s32 256, 256
      %24 = vsyncadd [#allocation6], %s23
      %s26 = sshll.u32 [#allocation5], 4
      %s27 = int_to_ptr.vmem [resolvable:$true] %s26
      %29 = dma.hbm_to_vmem [thread:$0]  %s1, 256, %s27, [#allocation6]
    $region9: #{tpu_custom_call.1} parent=1 // pred_fallthru
      _
    // Predicated region
    $region10: #{tpu_custom_call.1} parent=1 // pred_check
      _
    $region11: #{tpu_custom_call.1} parent=1 // pred_check_branch
      %31 = sbr.rel (0) target = $region13
    $region12: #{tpu_custom_call.1} parent=1 // pred_region
      %32 = dma.done [#allocation3], 256
    $region13: #{tpu_custom_call.1} parent=1 // pred_fallthru
      _
    // Predicated region
    $region14: #{tpu_custom_call.1} parent=1 // pred_check
      _
    $region15: #{tpu_custom_call.1} parent=1 // pred_check_branch
      %34 = sbr.rel (0) target = $region17
    $region16: #{tpu_custom_call.1} parent=1 // pred_region
      %35 = dma.done [#allocation6], 256
    $region17: #{tpu_custom_call.1} parent=1 // pred_fallthru
      _
    %v36 = vld [vmem:[#allocation2] sm:$0xff]
    %v37 = vld [vmem:[#allocation2 + $0x8] sm:$0xff]
    %v38 = vld [vmem:[#allocation5] sm:$0xff]
    %v39 = vld [vmem:[#allocation5 + $0x8] sm:$0xff]
    %v40 = vand.u32 2147483647, %v36
    %v41 = vand.u32 2147483647, %v37
    %v42 = vsub.f32 0.0, %v40
    %v43 = vsub.f32 0.0, %v41
    %v44 = vmul.f32 %v42, 1.442695
    %v45 = vpow.pop %v44
    %v46 = vmul.f32 %v43, 1.442695
    %v47 = vpow.pop %v46
    %v48 = vmax.f32 %v36, 0.0
    %v49 = vmax.f32 %v37, 0.0
    %v50 = vmul.f32 %v36, %v38
    %v51 = vmul.f32 %v37, %v39
    %v52 = vsub.f32 %v48, %v50
    %v53 = vsub.f32 %v49, %v51
    %v54 = vadd.f32 %v45, 1.0
    %v55 = vlog2.pop %v54
    %v56 = vmul.f32 %v55, 0.6931472
    %v57 = vmul.f32 -0.5, %v45
    %v58 = vadd.f32 %v57, 1.0
    %v59 = vmul.f32 %v58, %v45
    %v60 = vand.u32 2147483647, %v45
    %vm61 = vcmp.lt.f32.partialorder %v60, 0.0004427343
    %v62 = vsel %vm61, %v59, %v56
    %v63 = vadd.f32 %v47, 1.0
    %v64 = vlog2.pop %v63
    %v65 = vmul.f32 %v64, 0.6931472
    %v66 = vmul.f32 -0.5, %v47
    %v67 = vadd.f32 %v66, 1.0
    %v68 = vmul.f32 %v67, %v47
    %v69 = vand.u32 2147483647, %v47
    %vm70 = vcmp.lt.f32.partialorder %v69, 0.0004427343
    %v71 = vsel %vm70, %v68, %v65
    %v72 = vadd.f32 %v52, %v62
    %v73 = vadd.f32 %v53, %v71
    %v74 = vsub.f32 0.0, %v72
    %v75 = vsub.f32 0.0, %v73
    %v76 = vmul.f32 %v74, 1.442695
    %v77 = vpow.pop %v76
    %v78 = vmul.f32 %v75, 1.442695
    %v79 = vpow.pop %v78
    %v80 = vsub.f32 1.0, %v77
    %v81 = vsub.f32 1.0, %v79
    %v82 = vmax.f32 %v80, 0.0
    %v83 = vmax.f32 %v81, 0.0
    %v84 = vmul.f32 %v82, %v82
    %v85 = vmul.f32 %v83, %v83
    %v86 = vmul.f32 %v38, 0.25
    %v87 = vmul.f32 %v39, 0.25
    %v88 = vsub.f32 1.0, %v38
    %v89 = vsub.f32 1.0, %v39
    %v90 = vmul.f32 %v88, 0.75
    %v91 = vmul.f32 %v89, 0.75
    %v92 = vadd.f32 %v86, %v90
    %v93 = vadd.f32 %v87, %v91
    %v94 = vmul.f32 %v92, %v84
    %v95 = vmul.f32 %v93, %v85
    %v96 = vmul.f32 %v94, %v72
    %v97 = vmul.f32 %v95, %v73
    %v100 = vcombine.high %v96, %v96
    %v102 = vunpack.c.l.s4 1983009808
    %v103 = vunpack.c.0.s8 %v102
    %v104 = vlaneseq
    %v105 = vshrl.u32 %v104, 7
    %v106 = vsub.s32 %v103, %v105
    %v107 = vrot.slane %v96, %v106
    %v109 = vunpack.c.l.s4 1983009808
    %v110 = vunpack.c.0.s8 %v109
    %v111 = vlaneseq
    %v112 = vshrl.u32 %v111, 7
    %v113 = vsub.s32 %v110, %v112
    %v114 = vrot.slane %v100, %v113
    %v115 = vcombine.high %v107, %v107
    %v116 = vcombine.high %v114, %v114
    %v117 = vcombine.high %v97, %v97
    %v119 = vunpack.c.l.s4 1983009808
    %v120 = vunpack.c.0.s8 %v119
    %v121 = vlaneseq
    %v122 = vshrl.u32 %v121, 7
    %v123 = vsub.s32 %v120, %v122
    %v124 = vrot.slane %v97, %v123
    %v126 = vunpack.c.l.s4 1983009808
    %v127 = vunpack.c.0.s8 %v126
    %v128 = vlaneseq
    %v129 = vshrl.u32 %v128, 7
    %v130 = vsub.s32 %v127, %v129
    %v131 = vrot.slane %v117, %v130
    %v132 = vcombine.high %v124, %v124
    %v133 = vcombine.high %v131, %v131
    %vm142 = vcmask 1041408
    %v143 = vsel %vm142, %v107, 0.0
    %v144 = vrot.slane %v143, 4
    %v145 = vadd.f32 %v143, %v144
    %v146 = vrot.slane %v145, 2
    %v147 = vadd.f32 %v145, %v146
    %v148 = vrot.slane %v147, 1
    %v149 = vadd.f32 %v147, %v148
    %v150 = vsel %vm142, %v115, 0.0
    %v151 = vrot.slane %v150, 4
    %v152 = vadd.f32 %v150, %v151
    %v153 = vrot.slane %v152, 2
    %v154 = vadd.f32 %v152, %v153
    %v155 = vrot.slane %v154, 1
    %v156 = vadd.f32 %v154, %v155
    %v157 = vsel %vm142, %v114, 0.0
    %v158 = vrot.slane %v157, 4
    %v159 = vadd.f32 %v157, %v158
    %v160 = vrot.slane %v159, 2
    %v161 = vadd.f32 %v159, %v160
    %v162 = vrot.slane %v161, 1
    %v163 = vadd.f32 %v161, %v162
    %v164 = vsel %vm142, %v116, 0.0
    %v165 = vrot.slane %v164, 4
    %v166 = vadd.f32 %v164, %v165
    %v167 = vrot.slane %v166, 2
    %v168 = vadd.f32 %v166, %v167
    %v169 = vrot.slane %v168, 1
    %v170 = vadd.f32 %v168, %v169
    %v171 = vsel %vm142, %v124, 0.0
    %v172 = vrot.slane %v171, 4
    %v173 = vadd.f32 %v171, %v172
    %v174 = vrot.slane %v173, 2
    %v175 = vadd.f32 %v173, %v174
    %v176 = vrot.slane %v175, 1
    %v177 = vadd.f32 %v175, %v176
    %v178 = vsel %vm142, %v132, 0.0
    %v179 = vrot.slane %v178, 4
    %v180 = vadd.f32 %v178, %v179
    %v181 = vrot.slane %v180, 2
    %v182 = vadd.f32 %v180, %v181
    %v183 = vrot.slane %v182, 1
    %v184 = vadd.f32 %v182, %v183
    %v185 = vsel %vm142, %v131, 0.0
    %v186 = vrot.slane %v185, 4
    %v187 = vadd.f32 %v185, %v186
    %v188 = vrot.slane %v187, 2
    %v189 = vadd.f32 %v187, %v188
    %v190 = vrot.slane %v189, 1
    %v191 = vadd.f32 %v189, %v190
    %v192 = vsel %vm142, %v133, 0.0
    %v193 = vrot.slane %v192, 4
    %v194 = vadd.f32 %v192, %v193
    %v195 = vrot.slane %v194, 2
    %v196 = vadd.f32 %v194, %v195
    %v197 = vrot.slane %v196, 1
    %v198 = vadd.f32 %v196, %v197
    %v207 = vcombine.low %v149, %v156
    %v208 = vcombine.low %v163, %v170
    %v209 = vcombine.low %v177, %v184
    %v210 = vcombine.low %v191, %v198
    %v212 = vunpack.c.l.s4 1966171168
    %v213 = vunpack.c.0.s8 %v212
    %v214 = vlaneseq
    %v215 = vshrl.u32 %v214, 7
    %v216 = vsub.s32 %v213, %v215
    %v217 = vrot.slane %v207, %v216
    %v219 = vunpack.c.l.s4 1966171168
    %v220 = vunpack.c.0.s8 %v219
    %v221 = vlaneseq
    %v222 = vshrl.u32 %v221, 7
    %v223 = vsub.s32 %v220, %v222
    %v224 = vrot.slane %v208, %v223
    %v226 = vunpack.c.l.s4 1966171168
    %v227 = vunpack.c.0.s8 %v226
    %v228 = vlaneseq
    %v229 = vshrl.u32 %v228, 7
    %v230 = vsub.s32 %v227, %v229
    %v231 = vrot.slane %v209, %v230
    %v233 = vunpack.c.l.s4 1966171168
    %v234 = vunpack.c.0.s8 %v233
    %v235 = vlaneseq
    %v236 = vshrl.u32 %v235, 7
    %v237 = vsub.s32 %v234, %v236
    %v238 = vrot.slane %v210, %v237
    %v239 = vcombine.low %v217, %v224
    %v240 = vcombine.low %v231, %v238
    %v242 = vunpack.c.l.s4 1966171168
    %v243 = vunpack.c.0.s8 %v242
    %v244 = vlaneseq
    %v245 = vshrl.u32 %v244, 7
    %v246 = vsub.s32 %v243, %v245
    %v247 = vrot.slane %v239, %v246
    %v249 = vunpack.c.l.s4 1966171168
    %v250 = vunpack.c.0.s8 %v249
    %v251 = vlaneseq
    %v252 = vshrl.u32 %v251, 7
    %v253 = vsub.s32 %v250, %v252
    %v254 = vrot.slane %v240, %v253
    %v255 = vcombine.low %v247, %v254
    %257 = vst [vmem:[#allocation7] sm:$0xff] %v255
    // Predicated region
    $region18: #{tpu_custom_call.1} parent=1 // pred_check
      _
    $region19: #{tpu_custom_call.1} parent=1 // pred_check_branch
      %259 = sbr.rel (0) target = $region21
    $region20: #{tpu_custom_call.1} parent=1 // pred_region
      %s261 = ssub.s32 128, 128
      %262 = vsyncadd [#allocation4], %s261
      %s264 = sshll.u32 [#allocation7], 4
      %s265 = int_to_ptr.vmem [resolvable:$true] %s264
      %267 = dma.vmem_to_hbm [thread:$0]  %s265, 128, %s2, [#allocation4]
    $region21: #{tpu_custom_call.1} parent=1 // pred_fallthru
      _
    // Predicated region
    $region22: #{tpu_custom_call.1} parent=1 // pred_check
      _
    $region23: #{tpu_custom_call.1} parent=1 // pred_check_branch
      %269 = sbr.rel (0) target = $region25
    $region24: #{tpu_custom_call.1} parent=1 // pred_region
      %270 = dma.done [#allocation4], 128
    $region25: #{tpu_custom_call.1} parent=1 // pred_fallthru
      _
    %271 = vsyncpa [#allocation3], 1
    %272 = vsyncpa [#allocation6], 1
    %273 = vsyncpa [#allocation4], 1

</llo_original>
